<compile_context>
chip_gen: v7x
topology: tpu7x:2x2x1
jax: 0.10.0
libtpu: 0.0.40
codegen_flags: <defaults>
</compile_context>

<pallas_src>
import functools

import numpy as np
import jax
import jax.numpy as jnp
from jax.experimental import pallas as pl
from jax.experimental.pallas import tpu as pltpu


def _fused_decode_kernel(x_ref, w_ref, g_ref, b_ref, o_ref, *, eps, inv_count, s2, cout):
    """Fused ConvTranspose (one packed matmul) + BatchNorm(batch stats) + ReLU.

    x_ref: (S2*K, NPp)      bf16  phase-concatenated im2col patches (lane dim = padded N*P)
    w_ref: (S2*Cout, S2*K)  bf16  block-diagonal per-phase conv weights
    g_ref: (Cout, 1)        f32   BN weight (gamma)
    b_ref: (Cout, 1)        f32   BN bias   (beta)
    o_ref: (S2*Cout, NPp)   f32   output; rows p*Cout:(p+1)*Cout correspond to phase p
    """
    # Single MXU issue for all s^2 phases (and all batch/spatial positions on the lanes).
    y = jnp.dot(w_ref[...], x_ref[...], preferred_element_type=jnp.float32)  # (S2*Cout, NPp)

    # Single-pass (uncentered) batch statistics.  Padded lanes are zero and the conv bias is
    # dropped (it cancels exactly through training-mode BN), so plain sums are exact.
    rsum = jnp.sum(y, axis=1, keepdims=True)        # (S2*Cout, 1)
    rssq = jnp.sum(y * y, axis=1, keepdims=True)    # (S2*Cout, 1)

    # Fold the per-phase partial sums into per-channel sums (static, sublane-aligned slices).
    csum = rsum[0:cout]
    cssq = rssq[0:cout]
    for p in range(1, s2):
        csum = csum + rsum[p * cout:(p + 1) * cout]
        cssq = cssq + rssq[p * cout:(p + 1) * cout]

    mean = csum * inv_count
    var = cssq * inv_count - mean * mean            # biased (/N), as PyTorch uses to normalize
    inv_std = jax.lax.rsqrt(var + eps)
    scale = g_ref[...] * inv_std                    # (Cout, 1)
    shift = b_ref[...] - mean * scale               # (Cout, 1)

    # Hoisted broadcasts; fused BN affine + ReLU epilogue, one (Cout, NPp) slab per phase.
    scale_b = jnp.broadcast_to(scale, (cout, y.shape[1]))
    shift_b = jnp.broadcast_to(shift, (cout, y.shape[1]))
    for p in range(s2):
        yp = y[p * cout:(p + 1) * cout, :]
        o_ref[p * cout:(p + 1) * cout, :] = jnp.maximum(yp * scale_b + shift_b, 0.0)


def decoding_unit_forward(x_nchw, w_t, bias, gamma, beta, *, stride, padding, eps=1e-4):
    """relu(batchnorm(conv_transpose2d(x))) -- PyTorch-equivalent forward (training-mode BN)."""
    N, Cin, H, W = x_nchw.shape
    Cin_w, Cout, KH, KW = w_t.shape
    assert Cin == Cin_w
    s = int(stride)
    OH = (H - 1) * s - 2 * padding + KH
    OW = (W - 1) * s - 2 * padding + KW

    # Conv bias shifts the BN batch mean by exactly `bias`, so it cancels in (y - mean):
    # dropping it is exact for training-mode BN (would NOT be valid for eval-mode BN).
    del bias

    # --- sub-pixel (phase) decomposition of the transposed conv -------------------------
    assert OH % s == 0 and OW % s == 0, "phase decomposition assumes OH, OW divisible by stride"
    PH, PW = OH // s, OW // s

    def phase_taps(ph, ksz):
        # kernel tap kh contributes to output phase ph with input index ih = a + off
        return [(kh, (ph + padding - kh) // s) for kh in range(ksz)
                if (kh - ph - padding) % s == 0]

    taps_h = [phase_taps(ph, KH) for ph in range(s)]
    taps_w = [phase_taps(pw, KW) for pw in range(s)]
    # Uniform tap counts hold for this module's parameterization (K = 2 + s, padding = s).
    assert all(len(t) == len(taps_h[0]) for t in taps_h)
    assert all(len(t) == len(taps_w[0]) for t in taps_w)
    K = len(taps_h[0]) * len(taps_w[0]) * Cin
    S2 = s * s
    NP = N * PH * PW
    NP_pad = ((NP + 127) // 128) * 128            # lane-dense: pad lanes to a multiple of 128

    all_off_h = [off for t in taps_h for _, off in t]
    all_off_w = [off for t in taps_w for _, off in t]
    pad_lo_h = max(0, -min(all_off_h))
    pad_hi_h = max(0, (PH - 1) + max(all_off_h) - (H - 1))
    pad_lo_w = max(0, -min(all_off_w))
    pad_hi_w = max(0, (PW - 1) + max(all_off_w) - (W - 1))

    # im2col built directly in (K, N, PH, PW) order: one tiny leading-axes transpose of x,
    # then pure slices/stacks (no big (N,P,K)->(K,NP) transpose).
    x_cnhw = jnp.transpose(x_nchw, (1, 0, 2, 3)).astype(jnp.bfloat16)        # (Cin, N, H, W)
    x_p = jnp.pad(x_cnhw, ((0, 0), (0, 0), (pad_lo_h, pad_hi_h), (pad_lo_w, pad_hi_w)))
    w_f32 = w_t.astype(jnp.float32)   # ConvTranspose2d weight layout: (Cin, Cout, KH, KW)

    x_phases, w_phases = [], []
    for ph in range(s):
        for pw in range(s):
            cols, wrows = [], []
            for (kh, oh_off) in taps_h[ph]:
                for (kw, ow_off) in taps_w[pw]:
                    hs = oh_off + pad_lo_h
                    ws = ow_off + pad_lo_w
                    cols.append(x_p[:, :, hs:hs + PH, ws:ws + PW])   # (Cin, N, PH, PW)
                    wrows.append(w_f32[:, :, kh, kw])                # (Cin, Cout)
            xc = jnp.stack(cols, axis=0).reshape(K, NP)              # K ordering = (tap, cin)
            x_phases.append(xc)
            wk = jnp.stack(wrows, axis=0).reshape(K, Cout)           # same (tap, cin) ordering
            w_phases.append(wk.T)                                    # (Cout, K)

    # Pack the s^2 per-phase matmuls into ONE matmul:
    #   X_cat = concat_p(X_p) along K   -> (S2*K, NP_pad),   W_blk = block_diag_p(W_p).
    x_cat = jnp.concatenate(x_phases, axis=0)                        # (S2*K, NP)   bf16
    x_cat = jnp.pad(x_cat, ((0, 0), (0, NP_pad - NP)))               # zero-padded lanes
    w_blk = jnp.zeros((S2 * Cout, S2 * K), jnp.float32)
    for p in range(S2):
        w_blk = w_blk.at[p * Cout:(p + 1) * Cout, p * K:(p + 1) * K].set(w_phases[p])
    w_blk = w_blk.astype(jnp.bfloat16)
    g2d = gamma.reshape(Cout, 1).astype(jnp.float32)
    bt2d = beta.reshape(Cout, 1).astype(jnp.float32)

    flops = 2 * (S2 * Cout) * (S2 * K) * NP_pad
    bytes_accessed = (x_cat.size * 2 + w_blk.size * 2
                      + (S2 * Cout) * NP_pad * 4 + g2d.size * 4 + bt2d.size * 4)

    # --- single fused Pallas kernel: packed matmul + BN batch stats + affine + ReLU -----
    # TODO(synk): running_mean/running_var update (momentum=0.03) is training bookkeeping and
    #             does not affect the forward output, so it is not reproduced here.
    y = pl.pallas_call(
        functools.partial(_fused_decode_kernel, eps=float(eps),
                          inv_count=1.0 / float(N * OH * OW), s2=S2, cout=Cout),
        out_shape=jax.ShapeDtypeStruct((S2 * Cout, NP_pad), jnp.float32),
        grid=(1,),
        in_specs=[
            pl.BlockSpec((S2 * K, NP_pad), lambda i: (0, 0)),
            pl.BlockSpec((S2 * Cout, S2 * K), lambda i: (0, 0)),
            pl.BlockSpec((Cout, 1), lambda i: (0, 0)),
            pl.BlockSpec((Cout, 1), lambda i: (0, 0)),
        ],
        out_specs=pl.BlockSpec((S2 * Cout, NP_pad), lambda i: (0, 0)),
        compiler_params=pltpu.CompilerParams(dimension_semantics=("arbitrary",)),
        cost_estimate=pl.CostEstimate(flops=int(flops), transcendentals=int(Cout),
                                      bytes_accessed=int(bytes_accessed)),
    )(x_cat, w_blk, g2d, bt2d)

    # Interleave phases back to NCHW:
    # y[(ph*s + pw)*Cout + c, n*PH*PW + a*PW + b] = out[n, c, a*s + ph, b*s + pw]
    out = y[:, :NP].reshape(s, s, Cout, N, PH, PW)
    out = jnp.transpose(out, (3, 2, 4, 0, 5, 1)).reshape(N, Cout, OH, OW)
    return out


def _reference(x, w, b, gamma, beta, eps, stride, pad):
    """Direct numpy scatter-add implementation of the PyTorch forward (for verification)."""
    x = np.asarray(x, np.float32)
    w = np.asarray(w, np.float32)
    b = np.asarray(b, np.float32)
    gamma = np.asarray(gamma, np.float32)
    beta = np.asarray(beta, np.float32)
    N, Cin, H, W = x.shape
    _, Cout, KH, KW = w.shape
    Hf = (H - 1) * stride + KH
    Wf = (W - 1) * stride + KW
    y_full = np.zeros((N, Cout, Hf, Wf), np.float32)
    for ih in range(H):
        for iw in range(W):
            contrib = np.einsum('nc,cokl->nokl', x[:, :, ih, iw], w)
            y_full[:, :, ih * stride:ih * stride + KH, iw * stride:iw * stride + KW] += contrib
    OH = (H - 1) * stride - 2 * pad + KH
    OW = (W - 1) * stride - 2 * pad + KW
    y = y_full[:, :, pad:pad + OH, pad:pad + OW] + b[None, :, None, None]
    mean = y.mean(axis=(0, 2, 3))
    var = y.var(axis=(0, 2, 3))
    yn = (y - mean[None, :, None, None]) / np.sqrt(var[None, :, None, None] + eps)
    return np.maximum(yn * gamma[None, :, None, None] + beta[None, :, None, None], 0.0)


if __name__ == "__main__":
    compressionProps = {"feature_compression_factor": 2, "resolution_compression_factor": 2}
    prevLayerProps = {"PrevLayerOutChannel": 8}

    prev_ch = prevLayerProps["PrevLayerOutChannel"]                           # Cout = 8
    cin = prev_ch // compressionProps["feature_compression_factor"]           # Cin  = 4
    k = 2 + compressionProps["resolution_compression_factor"]                 # kernel 4x4
    stride = compressionProps["resolution_compression_factor"]                # 2
    pad = compressionProps["resolution_compression_factor"]                   # 2
    eps = 1e-4                                                                # BatchNorm eps

    N, H, W = 2, 16, 16
    key = jax.random.PRNGKey(0)
    kx, kw_, kb, kg, kbt = jax.random.split(key, 5)
    x = jax.random.normal(kx, (N, cin, H, W), jnp.float32)
    # ConvTranspose2d weight layout: (Cin, Cout, KH, KW)
    w_t = 0.1 * jax.random.normal(kw_, (cin, prev_ch, k, k), jnp.float32)
    bias = 0.1 * jax.random.normal(kb, (prev_ch,), jnp.float32)
    gamma = 1.0 + 0.1 * jax.random.normal(kg, (prev_ch,), jnp.float32)
    beta = 0.1 * jax.random.normal(kbt, (prev_ch,), jnp.float32)

    out = decoding_unit_forward(x, w_t, bias, gamma, beta, stride=stride, padding=pad, eps=eps)
    out = jax.block_until_ready(out)

    ref = _reference(x, w_t, bias, gamma, beta, eps, stride, pad)
    assert out.shape == ref.shape, (out.shape, ref.shape)
    np.testing.assert_allclose(np.asarray(out), ref, atol=3e-2, rtol=3e-2)
    print("KERNEL_OK")
</pallas_src>

<mosaic_0001>
module attributes {stable_mosaic.version = 11 : i64} {
  func.func @_fused_decode_kernel(%arg0: i32, %arg1: memref<64x512xbf16, #tpu.memory_space<vmem>>, %arg2: memref<32x64xbf16, #tpu.memory_space<vmem>>, %arg3: memref<8x1xf32, #tpu.memory_space<vmem>>, %arg4: memref<8x1xf32, #tpu.memory_space<vmem>>, %arg5: memref<32x512xf32, #tpu.memory_space<vmem>>) attributes {dimension_semantics = [#tpu.dimension_semantics<arbitrary>], iteration_bounds = array<i64: 1>, scalar_prefetch = 0 : i64, scratch_operands = 0 : i64, tpu.core_type = #tpu.core_type<tc>, window_params = [{pipeline_mode = #tpu.pipeline_mode<synchronous>, transform_indices = @transform_0, window_bounds = array<i64: 64, 512>}, {pipeline_mode = #tpu.pipeline_mode<synchronous>, transform_indices = @transform_1, window_bounds = array<i64: 32, 64>}, {pipeline_mode = #tpu.pipeline_mode<synchronous>, transform_indices = @transform_2, window_bounds = array<i64: 8, 1>}, {pipeline_mode = #tpu.pipeline_mode<synchronous>, transform_indices = @transform_3, window_bounds = array<i64: 8, 1>}, {pipeline_mode = #tpu.pipeline_mode<synchronous>, transform_indices = @transform_4, window_bounds = array<i64: 32, 512>}]} {
    %c0 = arith.constant 0 : index
    %c0_0 = arith.constant 0 : index
    %0 = vector.load %arg2[%c0, %c0_0] : memref<32x64xbf16, #tpu.memory_space<vmem>>, vector<32x64xbf16>
    %c0_1 = arith.constant 0 : index
    %c0_2 = arith.constant 0 : index
    %1 = vector.load %arg1[%c0_1, %c0_2] : memref<64x512xbf16, #tpu.memory_space<vmem>>, vector<64x512xbf16>
    %cst = arith.constant dense<0.000000e+00> : vector<32x512xf32>
    %2 = tpu.matmul %0, %1, %cst {dimension_numbers = #tpu.dot_dimension_numbers<[1], [0], [0], [1], [0, 0, 1, 1], [], []>} : vector<32x64xbf16>, vector<64x512xbf16>, vector<32x512xf32> -> vector<32x512xf32>
    %cst_3 = arith.constant dense<0.000000e+00> : vector<32xf32>
    %3 = vector.multi_reduction <add>, %2, %cst_3 [1] : vector<32x512xf32> to vector<32xf32>
    %4 = vector.shape_cast %3 : vector<32xf32> to vector<32x1xf32>
    %5 = arith.mulf %2, %2 : vector<32x512xf32>
    %cst_4 = arith.constant dense<0.000000e+00> : vector<32xf32>
    %6 = vector.multi_reduction <add>, %5, %cst_4 [1] : vector<32x512xf32> to vector<32xf32>
    %7 = vector.shape_cast %6 : vector<32xf32> to vector<32x1xf32>
    %8 = vector.extract_strided_slice %4 {offsets = [0, 0], sizes = [8, 1], strides = [1, 1]} : vector<32x1xf32> to vector<8x1xf32>
    %9 = vector.extract_strided_slice %7 {offsets = [0, 0], sizes = [8, 1], strides = [1, 1]} : vector<32x1xf32> to vector<8x1xf32>
    %10 = vector.extract_strided_slice %4 {offsets = [8, 0], sizes = [8, 1], strides = [1, 1]} : vector<32x1xf32> to vector<8x1xf32>
    %11 = arith.addf %8, %10 : vector<8x1xf32>
    %12 = vector.extract_strided_slice %7 {offsets = [8, 0], sizes = [8, 1], strides = [1, 1]} : vector<32x1xf32> to vector<8x1xf32>
    %13 = arith.addf %9, %12 : vector<8x1xf32>
    %14 = vector.extract_strided_slice %4 {offsets = [16, 0], sizes = [8, 1], strides = [1, 1]} : vector<32x1xf32> to vector<8x1xf32>
    %15 = arith.addf %11, %14 : vector<8x1xf32>
    %16 = vector.extract_strided_slice %7 {offsets = [16, 0], sizes = [8, 1], strides = [1, 1]} : vector<32x1xf32> to vector<8x1xf32>
    %17 = arith.addf %13, %16 : vector<8x1xf32>
    %18 = vector.extract_strided_slice %4 {offsets = [24, 0], sizes = [8, 1], strides = [1, 1]} : vector<32x1xf32> to vector<8x1xf32>
    %19 = arith.addf %15, %18 : vector<8x1xf32>
    %20 = vector.extract_strided_slice %7 {offsets = [24, 0], sizes = [8, 1], strides = [1, 1]} : vector<32x1xf32> to vector<8x1xf32>
    %21 = arith.addf %17, %20 : vector<8x1xf32>
    %cst_5 = arith.constant 5.55555569E-4 : f32
    %22 = vector.broadcast %cst_5 : f32 to vector<8x1xf32>
    %23 = arith.mulf %19, %22 : vector<8x1xf32>
    %cst_6 = arith.constant 5.55555569E-4 : f32
    %24 = vector.broadcast %cst_6 : f32 to vector<8x1xf32>
    %25 = arith.mulf %21, %24 : vector<8x1xf32>
    %26 = arith.mulf %23, %23 : vector<8x1xf32>
    %27 = arith.subf %25, %26 : vector<8x1xf32>
    %cst_7 = arith.constant 9.99999974E-5 : f32
    %28 = vector.broadcast %cst_7 : f32 to vector<8x1xf32>
    %29 = arith.addf %27, %28 : vector<8x1xf32>
    %30 = math.rsqrt %29 : vector<8x1xf32>
    %c0_8 = arith.constant 0 : index
    %c0_9 = arith.constant 0 : index
    %31 = vector.load %arg3[%c0_8, %c0_9] : memref<8x1xf32, #tpu.memory_space<vmem>>, vector<8x1xf32>
    %32 = arith.mulf %31, %30 : vector<8x1xf32>
    %c0_10 = arith.constant 0 : index
    %c0_11 = arith.constant 0 : index
    %33 = vector.load %arg4[%c0_10, %c0_11] : memref<8x1xf32, #tpu.memory_space<vmem>>, vector<8x1xf32>
    %34 = arith.mulf %23, %32 : vector<8x1xf32>
    %35 = arith.subf %33, %34 : vector<8x1xf32>
    %36 = vector.shape_cast %32 : vector<8x1xf32> to vector<8x1xf32>
    %37 = vector.broadcast %36 : vector<8x1xf32> to vector<8x512xf32>
    %38 = vector.shape_cast %35 : vector<8x1xf32> to vector<8x1xf32>
    %39 = vector.broadcast %38 : vector<8x1xf32> to vector<8x512xf32>
    %40 = vector.extract_strided_slice %2 {offsets = [0, 0], sizes = [8, 512], strides = [1, 1]} : vector<32x512xf32> to vector<8x512xf32>
    %41 = arith.mulf %40, %37 : vector<8x512xf32>
    %42 = arith.addf %41, %39 : vector<8x512xf32>
    %cst_12 = arith.constant 0.000000e+00 : f32
    %43 = vector.broadcast %cst_12 : f32 to vector<8x512xf32>
    %44 = arith.maximumf %42, %43 : vector<8x512xf32>
    %c0_13 = arith.constant 0 : index
    %c0_14 = arith.constant 0 : index
    %45 = vector.load %arg5[%c0_13, %c0_14] : memref<32x512xf32, #tpu.memory_space<vmem>>, vector<8x512xf32>
    tpu.vector_store %arg5[%c0_13, %c0_14], %44 {strides = array<i32>} : memref<32x512xf32, #tpu.memory_space<vmem>>, vector<8x512xf32>,
    %46 = vector.extract_strided_slice %2 {offsets = [8, 0], sizes = [8, 512], strides = [1, 1]} : vector<32x512xf32> to vector<8x512xf32>
    %47 = arith.mulf %46, %37 : vector<8x512xf32>
    %48 = arith.addf %47, %39 : vector<8x512xf32>
    %cst_15 = arith.constant 0.000000e+00 : f32
    %49 = vector.broadcast %cst_15 : f32 to vector<8x512xf32>
    %50 = arith.maximumf %48, %49 : vector<8x512xf32>
    %c8 = arith.constant 8 : index
    %c0_16 = arith.constant 0 : index
    %51 = vector.load %arg5[%c8, %c0_16] : memref<32x512xf32, #tpu.memory_space<vmem>>, vector<8x512xf32>
    tpu.vector_store %arg5[%c8, %c0_16], %50 {strides = array<i32>} : memref<32x512xf32, #tpu.memory_space<vmem>>, vector<8x512xf32>,
    %52 = vector.extract_strided_slice %2 {offsets = [16, 0], sizes = [8, 512], strides = [1, 1]} : vector<32x512xf32> to vector<8x512xf32>
    %53 = arith.mulf %52, %37 : vector<8x512xf32>
    %54 = arith.addf %53, %39 : vector<8x512xf32>
    %cst_17 = arith.constant 0.000000e+00 : f32
    %55 = vector.broadcast %cst_17 : f32 to vector<8x512xf32>
    %56 = arith.maximumf %54, %55 : vector<8x512xf32>
    %c16 = arith.constant 16 : index
    %c0_18 = arith.constant 0 : index
    %57 = vector.load %arg5[%c16, %c0_18] : memref<32x512xf32, #tpu.memory_space<vmem>>, vector<8x512xf32>
    tpu.vector_store %arg5[%c16, %c0_18], %56 {strides = array<i32>} : memref<32x512xf32, #tpu.memory_space<vmem>>, vector<8x512xf32>,
    %58 = vector.extract_strided_slice %2 {offsets = [24, 0], sizes = [8, 512], strides = [1, 1]} : vector<32x512xf32> to vector<8x512xf32>
    %59 = arith.mulf %58, %37 : vector<8x512xf32>
    %60 = arith.addf %59, %39 : vector<8x512xf32>
    %cst_19 = arith.constant 0.000000e+00 : f32
    %61 = vector.broadcast %cst_19 : f32 to vector<8x512xf32>
    %62 = arith.maximumf %60, %61 : vector<8x512xf32>
    %c24 = arith.constant 24 : index
    %c0_20 = arith.constant 0 : index
    %63 = vector.load %arg5[%c24, %c0_20] : memref<32x512xf32, #tpu.memory_space<vmem>>, vector<8x512xf32>
    tpu.vector_store %arg5[%c24, %c0_20], %62 {strides = array<i32>} : memref<32x512xf32, #tpu.memory_space<vmem>>, vector<8x512xf32>,
    return
  }
  func.func @transform_0(%arg0: i32) -> (i32, i32) {
    %c0_i32 = arith.constant 0 : i32
    %c0_i32_0 = arith.constant 0 : i32
    %c0_i32_1 = arith.constant 0 : i32
    return %c0_i32, %c0_i32_0 : i32, i32
  }
  func.func @transform_1(%arg0: i32) -> (i32, i32) {
    %c0_i32 = arith.constant 0 : i32
    %c0_i32_0 = arith.constant 0 : i32
    %c0_i32_1 = arith.constant 0 : i32
    return %c0_i32, %c0_i32_0 : i32, i32
  }
  func.func @transform_2(%arg0: i32) -> (i32, i32) {
    %c0_i32 = arith.constant 0 : i32
    %c0_i32_0 = arith.constant 0 : i32
    %c0_i32_1 = arith.constant 0 : i32
    return %c0_i32, %c0_i32_0 : i32, i32
  }
  func.func @transform_3(%arg0: i32) -> (i32, i32) {
    %c0_i32 = arith.constant 0 : i32
    %c0_i32_0 = arith.constant 0 : i32
    %c0_i32_1 = arith.constant 0 : i32
    return %c0_i32, %c0_i32_0 : i32, i32
  }
  func.func @transform_4(%arg0: i32) -> (i32, i32) {
    %c0_i32 = arith.constant 0 : i32
    %c0_i32_0 = arith.constant 0 : i32
    %c0_i32_1 = arith.constant 0 : i32
    return %c0_i32, %c0_i32_0 : i32, i32
  }
}

</mosaic_0001>

<llo_original>
// kernel: tpu_custom_call.1
$region0: #{tpu_custom_call.1}
  #allocation0 [shape = 'u32[]', space=smem, size = 0x4, offset = 0x4, fixed_abs, tag = 'smem constant byte address 0x4 - core index']
  #allocation1 [shape = 'u32[144,128]{1,0:T(1,128)}', space=vmem, size = 0x12000, scoped, tag = 'internal scratch']
  %s0 = inlined_call_operand.hbm [shape: bf16[64,512], index: 0, kind: input, shape index: {}]
  %s1 = inlined_call_operand.vmem [shape: bf16[32,64], index: 1, kind: input, shape index: {}]
  %s2 = inlined_call_operand.vmem [shape: f32[8,1], index: 2, kind: input, shape index: {}]
  %s3 = inlined_call_operand.vmem [shape: f32[8,1], index: 3, kind: input, shape index: {}]
  %s4 = inlined_call_operand.hbm [shape: f32[32,512], index: 4, kind: output, shape index: {}]
  %s5 = sld [smem:[#allocation0]]
  $region30: #{tpu_custom_call.1} parent=0
    _
  %s7 = ssub.s32 1, %s5
  %s8 = scalar_select 0, %s7, %s5
  $region1: #{tpu_custom_call.1} parent=0
    #allocation2 [shape = 'u8[65536]{0}', space=vmem, size = 0x10000, scoped, tag = 'input window, operand 0, single buffered']
    #allocation3 [shape = 's32[1]{0}', space=sflag, size = 0x4, scoped, tag = 'scoped memory for tpu_custom_call.1']
    #allocation4 [shape = 's32[1]{0}', space=sflag, size = 0x4, scoped, tag = 'scoped memory for tpu_custom_call.1']
    #allocation5 [shape = 'u8[65536]{0}', space=vmem, size = 0x10000, scoped, tag = 'output window, operand 0, single buffered']
    %9 = vsyncpa [#allocation3], 0
    %10 = vsyncpa [#allocation4], 0
    // Predicated region
    $region2: #{tpu_custom_call.1} parent=1 // pred_check
      _
    $region3: #{tpu_custom_call.1} parent=1 // pred_check_branch
      %12 = sbr.rel (0) target = $region5
    $region4: #{tpu_custom_call.1} parent=1 // pred_region
      %s14 = ssub.s32 2048, 2048
      %15 = vsyncadd [#allocation3], %s14
      %s16 = sshll.u32 [#allocation2], 4
      %s17 = int_to_ptr.vmem [resolvable:$true] %s16
      %22 = dma.hbm_to_vmem [thread:$0]  %s0, 2048, %s17, [#allocation3], 256, 256, 16
    $region5: #{tpu_custom_call.1} parent=1 // pred_fallthru
      _
    // Predicated region
    $region6: #{tpu_custom_call.1} parent=1 // pred_check
      _
    $region7: #{tpu_custom_call.1} parent=1 // pred_check_branch
      %24 = sbr.rel (0) target = $region9
    $region8: #{tpu_custom_call.1} parent=1 // pred_region
      _
    $region9: #{tpu_custom_call.1} parent=1 // pred_fallthru
      _
    // Predicated region
    $region10: #{tpu_custom_call.1} parent=1 // pred_check
      _
    $region11: #{tpu_custom_call.1} parent=1 // pred_check_branch
      %26 = sbr.rel (0) target = $region13
    $region12: #{tpu_custom_call.1} parent=1 // pred_region
      _
    $region13: #{tpu_custom_call.1} parent=1 // pred_fallthru
      _
    // Predicated region
    $region14: #{tpu_custom_call.1} parent=1 // pred_check
      _
    $region15: #{tpu_custom_call.1} parent=1 // pred_check_branch
      %28 = sbr.rel (0) target = $region17
    $region16: #{tpu_custom_call.1} parent=1 // pred_region
      _
    $region17: #{tpu_custom_call.1} parent=1 // pred_fallthru
      _
    // Predicated region
    $region18: #{tpu_custom_call.1} parent=1 // pred_check
      _
    $region19: #{tpu_custom_call.1} parent=1 // pred_check_branch
      %30 = sbr.rel (0) target = $region21
    $region20: #{tpu_custom_call.1} parent=1 // pred_region
      %31 = dma.done [#allocation3], 2048
    $region21: #{tpu_custom_call.1} parent=1 // pred_fallthru
      _
    %v33 = vld [vmem:[%s1] sm:$0xf]
    %v34 = vld [vmem:[%s1 + $0x4] sm:$0xf]
    %v35 = vld [vmem:[%s1 + $0x8] sm:$0xf]
    %v36 = vld [vmem:[%s1 + $0xc] sm:$0xf]
    %v37 = vld [vmem:[#allocation2] sm:$0xff]
    %v38 = vld [vmem:[#allocation2 + $0x8] sm:$0xff]
    %v39 = vld [vmem:[#allocation2 + $0x10] sm:$0xff]
    %v40 = vld [vmem:[#allocation2 + $0x18] sm:$0xff]
    %v41 = vld [vmem:[#allocation2 + $0x20] sm:$0xff]
    %v42 = vld [vmem:[#allocation2 + $0x28] sm:$0xff]
    %v43 = vld [vmem:[#allocation2 + $0x30] sm:$0xff]
    %v44 = vld [vmem:[#allocation2 + $0x38] sm:$0xff]
    %v45 = vld [vmem:[#allocation2 + $0x40] sm:$0xff]
    %v46 = vld [vmem:[#allocation2 + $0x48] sm:$0xff]
    %v47 = vld [vmem:[#allocation2 + $0x50] sm:$0xff]
    %v48 = vld [vmem:[#allocation2 + $0x58] sm:$0xff]
    %v49 = vld [vmem:[#allocation2 + $0x60] sm:$0xff]
    %v50 = vld [vmem:[#allocation2 + $0x68] sm:$0xff]
    %v51 = vld [vmem:[#allocation2 + $0x70] sm:$0xff]
    %v52 = vld [vmem:[#allocation2 + $0x78] sm:$0xff]
    %v57 = vunpack.c.l.b16 %v33
    %v58 = vunpack.c.l.b16 %v34
    %v59 = vunpack.c.l.b16 %v35
    %v60 = vunpack.c.l.b16 %v36
    %v61 = vpack.c.b16 %v58, %v57
    %v62 = vpack.c.b16 %v60, %v59
    %v79 = vunpack.c.l.b16 %v37
    %v80 = vunpack.c.h.b16 %v37
    %v81 = vunpack.c.l.b16 %v38
    %v82 = vunpack.c.h.b16 %v38
    %v83 = vunpack.c.l.b16 %v39
    %v84 = vunpack.c.h.b16 %v39
    %v85 = vunpack.c.l.b16 %v40
    %v86 = vunpack.c.h.b16 %v40
    %v87 = vunpack.c.l.b16 %v41
    %v88 = vunpack.c.h.b16 %v41
    %v89 = vunpack.c.l.b16 %v42
    %v90 = vunpack.c.h.b16 %v42
    %v91 = vunpack.c.l.b16 %v43
    %v92 = vunpack.c.h.b16 %v43
    %v93 = vunpack.c.l.b16 %v44
    %v94 = vunpack.c.h.b16 %v44
    %v95 = vunpack.c.l.b16 %v45
    %v96 = vunpack.c.h.b16 %v45
    %v97 = vunpack.c.l.b16 %v46
    %v98 = vunpack.c.h.b16 %v46
    %v99 = vunpack.c.l.b16 %v47
    %v100 = vunpack.c.h.b16 %v47
    %v101 = vunpack.c.l.b16 %v48
    %v102 = vunpack.c.h.b16 %v48
    %v103 = vunpack.c.l.b16 %v49
    %v104 = vunpack.c.h.b16 %v49
    %v105 = vunpack.c.l.b16 %v50
    %v106 = vunpack.c.h.b16 %v50
    %v107 = vunpack.c.l.b16 %v51
    %v108 = vunpack.c.h.b16 %v51
    %v109 = vunpack.c.l.b16 %v52
    %v110 = vunpack.c.h.b16 %v52
    %v111 = vpack.c.b16 %v83, %v79
    %v112 = vpack.c.b16 %v84, %v80
    %v113 = vpack.c.b16 %v85, %v81
    %v114 = vpack.c.b16 %v86, %v82
    %v115 = vpack.c.b16 %v91, %v87
    %v116 = vpack.c.b16 %v92, %v88
    %v117 = vpack.c.b16 %v93, %v89
    %v118 = vpack.c.b16 %v94, %v90
    %v119 = vpack.c.b16 %v99, %v95
    %v120 = vpack.c.b16 %v100, %v96
    %v121 = vpack.c.b16 %v101, %v97
    %v122 = vpack.c.b16 %v102, %v98
    %v123 = vpack.c.b16 %v107, %v103
    %v124 = vpack.c.b16 %v108, %v104
    %v125 = vpack.c.b16 %v109, %v105
    %v126 = vpack.c.b16 %v110, %v106
    %vm143 = vcmask 523264
    %v145 = vsel %vm143, %v61, 0
    %v148 = vsel %vm143, %v62, 0
    %150 = vmatprep.subr.bf16.mxu0 %v112
    %151 = vmatpush1.bf16.msra.mxu0 %v111
    %152 = vmatprep.subr.bf16.mxu0 %v116
    %153 = vmatpush1.bf16.msra.mxu0 %v115
    %154 = vmatprep.subr.bf16.mxu0 %v120
    %155 = vmatpush1.bf16.msra.mxu0 %v119
    %156 = vmatprep.subr.bf16.mxu0 %v124
    %157 = vmatpush1.bf16.msra.mxu0 %v123
    %158 = vmatprep.subr.bf16.mxu0 0
    %159 = vmatpush1.bf16.msra.mxu0 0
    %160 = vmatprep.subr.bf16.mxu0 0
    %161 = vmatpush1.bf16.msra.mxu0 0
    %162 = vmatprep.subr.bf16.mxu0 0
    %163 = vmatpush1.bf16.msra.mxu0 0
    %164 = vmatprep.subr.bf16.mxu0 0
    %165 = vmatpush1.bf16.msra.mxu0 0
    %166 = vmatprep.subr.bf16.mxu0 0
    %167 = vmatpush1.bf16.msra.mxu0 0
    %168 = vmatprep.subr.bf16.mxu0 0
    %169 = vmatpush1.bf16.msra.mxu0 0
    %170 = vmatprep.subr.bf16.mxu0 0
    %171 = vmatpush1.bf16.msra.mxu0 0
    %172 = vmatprep.subr.bf16.mxu0 0
    %173 = vmatpush1.bf16.msra.mxu0 0
    %174 = vmatprep.subr.bf16.mxu0 0
    %175 = vmatpush1.bf16.msra.mxu0 0
    %176 = vmatprep.subr.bf16.mxu0 0
    %177 = vmatpush1.bf16.msra.mxu0 0
    %178 = vmatprep.subr.bf16.mxu0 0
    %179 = vmatpush1.bf16.msra.mxu0 0
    %180 = vmatprep.subr.bf16.mxu0 0
    %181 = vmatpush1.bf16.msra.mxu0 0
    %182 = vmatprep.mubr.bf16.mxu0 0
    %183 = vmatmul.mubr.bf16.gmra.mrb[0].mxu0 %v145
    %v184 = vpop.f32.mrb[0].mxu0
    %v185 = vadd.f32 0.0, %v184
    %v186 = vpop.f32.mrb[0].mxu0
    %v187 = vadd.f32 0.0, %v186
    %v188 = vpop.f32.mrb[0].mxu0
    %v189 = vadd.f32 0.0, %v188
    %v190 = vpop.f32.mrb[0].mxu0
    %v191 = vadd.f32 0.0, %v190
    %192 = vmatprep.mubr.bf16.mxu0 0
    %193 = vmatmul.mubr.bf16.gmra.mrb[0].mxu0 %v148
    %v194 = vpop.f32.mrb[0].mxu0
    %v195 = vadd.f32 0.0, %v194
    %v196 = vpop.f32.mrb[0].mxu0
    %v197 = vadd.f32 0.0, %v196
    %v198 = vpop.f32.mrb[0].mxu0
    %v199 = vadd.f32 0.0, %v198
    %v200 = vpop.f32.mrb[0].mxu0
    %v201 = vadd.f32 0.0, %v200
    %202 = vdwg.mxu0
    %203 = vmatprep.subr.bf16.mxu0 %v114
    %204 = vmatpush1.bf16.msra.mxu0 %v113
    %205 = vmatprep.subr.bf16.mxu0 %v118
    %206 = vmatpush1.bf16.msra.mxu0 %v117
    %207 = vmatprep.subr.bf16.mxu0 %v122
    %208 = vmatpush1.bf16.msra.mxu0 %v121
    %209 = vmatprep.subr.bf16.mxu0 %v126
    %210 = vmatpush1.bf16.msra.mxu0 %v125
    %211 = vmatprep.subr.bf16.mxu0 0
    %212 = vmatpush1.bf16.msra.mxu0 0
    %213 = vmatprep.subr.bf16.mxu0 0
    %214 = vmatpush1.bf16.msra.mxu0 0
    %215 = vmatprep.subr.bf16.mxu0 0
    %216 = vmatpush1.bf16.msra.mxu0 0
    %217 = vmatprep.subr.bf16.mxu0 0
    %218 = vmatpush1.bf16.msra.mxu0 0
    %219 = vmatprep.subr.bf16.mxu0 0
    %220 = vmatpush1.bf16.msra.mxu0 0
    %221 = vmatprep.subr.bf16.mxu0 0
    %222 = vmatpush1.bf16.msra.mxu0 0
    %223 = vmatprep.subr.bf16.mxu0 0
    %224 = vmatpush1.bf16.msra.mxu0 0
    %225 = vmatprep.subr.bf16.mxu0 0
    %226 = vmatpush1.bf16.msra.mxu0 0
    %227 = vmatprep.subr.bf16.mxu0 0
    %228 = vmatpush1.bf16.msra.mxu0 0
    %229 = vmatprep.subr.bf16.mxu0 0
    %230 = vmatpush1.bf16.msra.mxu0 0
    %231 = vmatprep.subr.bf16.mxu0 0
    %232 = vmatpush1.bf16.msra.mxu0 0
    %233 = vmatprep.subr.bf16.mxu0 0
    %234 = vmatpush1.bf16.msra.mxu0 0
    %235 = vmatprep.mubr.bf16.mxu0 0
    %236 = vmatmul.mubr.bf16.gmra.mrb[0].mxu0 %v145
    %v237 = vpop.f32.mrb[0].mxu0
    %v238 = vadd.f32 0.0, %v237
    %v239 = vpop.f32.mrb[0].mxu0
    %v240 = vadd.f32 0.0, %v239
    %v241 = vpop.f32.mrb[0].mxu0
    %v242 = vadd.f32 0.0, %v241
    %v243 = vpop.f32.mrb[0].mxu0
    %v244 = vadd.f32 0.0, %v243
    %245 = vmatprep.mubr.bf16.mxu0 0
    %246 = vmatmul.mubr.bf16.gmra.mrb[0].mxu0 %v148
    %v247 = vpop.f32.mrb[0].mxu0
    %v248 = vadd.f32 0.0, %v247
    %v249 = vpop.f32.mrb[0].mxu0
    %v250 = vadd.f32 0.0, %v249
    %v251 = vpop.f32.mrb[0].mxu0
    %v252 = vadd.f32 0.0, %v251
    %v253 = vpop.f32.mrb[0].mxu0
    %v254 = vadd.f32 0.0, %v253
    %255 = vdwg.mxu0
    %v256 = vadd.f32 %v185, %v187
    %v257 = vadd.f32 %v256, %v238
    %v258 = vadd.f32 %v257, %v240
    %259 = vadd.xlane.f32.xlu0 %v258
    %v260 = vpop.xlane.xlu0 %259
    %v261 = vadd.f32 %v189, %v191
    %v262 = vadd.f32 %v261, %v242
    %v263 = vadd.f32 %v262, %v244
    %264 = vadd.xlane.f32.xlu0 %v263
    %v265 = vpop.xlane.xlu0 %264
    %v266 = vadd.f32 %v195, %v197
    %v267 = vadd.f32 %v266, %v248
    %v268 = vadd.f32 %v267, %v250
    %269 = vadd.xlane.f32.xlu0 %v268
    %v270 = vpop.xlane.xlu0 %269
    %v271 = vadd.f32 %v199, %v201
    %v272 = vadd.f32 %v271, %v252
    %v273 = vadd.f32 %v272, %v254
    %274 = vadd.xlane.f32.xlu0 %v273
    %v275 = vpop.xlane.xlu0 %274
    %v276 = vmul.f32 %v185, %v185
    %v277 = vmul.f32 %v187, %v187
    %v278 = vmul.f32 %v238, %v238
    %v279 = vmul.f32 %v240, %v240
    %v280 = vmul.f32 %v189, %v189
    %v281 = vmul.f32 %v191, %v191
    %v282 = vmul.f32 %v242, %v242
    %v283 = vmul.f32 %v244, %v244
    %v284 = vmul.f32 %v195, %v195
    %v285 = vmul.f32 %v197, %v197
    %v286 = vmul.f32 %v248, %v248
    %v287 = vmul.f32 %v250, %v250
    %v288 = vmul.f32 %v199, %v199
    %v289 = vmul.f32 %v201, %v201
    %v290 = vmul.f32 %v252, %v252
    %v291 = vmul.f32 %v254, %v254
    %v292 = vadd.f32 %v276, %v277
    %v293 = vadd.f32 %v292, %v278
    %v294 = vadd.f32 %v293, %v279
    %295 = vadd.xlane.f32.xlu0 %v294
    %v296 = vpop.xlane.xlu0 %295
    %v297 = vadd.f32 %v280, %v281
    %v298 = vadd.f32 %v297, %v282
    %v299 = vadd.f32 %v298, %v283
    %300 = vadd.xlane.f32.xlu0 %v299
    %v301 = vpop.xlane.xlu0 %300
    %v302 = vadd.f32 %v284, %v285
    %v303 = vadd.f32 %v302, %v286
    %v304 = vadd.f32 %v303, %v287
    %305 = vadd.xlane.f32.xlu0 %v304
    %v306 = vpop.xlane.xlu0 %305
    %v307 = vadd.f32 %v288, %v289
    %v308 = vadd.f32 %v307, %v290
    %v309 = vadd.f32 %v308, %v291
    %310 = vadd.xlane.f32.xlu0 %v309
    %v311 = vpop.xlane.xlu0 %310
    %v312 = vadd.f32 %v260, %v265
    %v313 = vadd.f32 %v296, %v301
    %v314 = vadd.f32 %v312, %v270
    %v315 = vadd.f32 %v313, %v306
    %v316 = vadd.f32 %v314, %v275
    %v317 = vadd.f32 %v315, %v311
    %v318 = vmul.f32 %v316, 0.00055555557
    %v319 = vmul.f32 %v317, 0.00055555557
    %v320 = vmul.f32 %v318, %v318
    %v321 = vsub.f32 %v319, %v320
    %v322 = vadd.f32 %v321, 0.0001
    %v323 = vrsqrt.pop %v322
    %v324 = vld [vmem:[%s2] sm:$0xff]
    %v325 = vmul.f32 %v324, %v323
    %v326 = vld [vmem:[%s3] sm:$0xff]
    %v327 = vmul.f32 %v318, %v325
    %v328 = vsub.f32 %v326, %v327
    %330 = vset.pattern.permute.xlu0 0
    %331 = vperm.xlu0 %330, %v325
    %v332 = vpop.permute.xlu0 %331
    %335 = vset.pattern.permute.xlu0 0
    %336 = vperm.xlu0 %335, %v328
    %v337 = vpop.permute.xlu0 %336
    %v339 = vmul.f32 %v185, %v332
    %v340 = vmul.f32 %v187, %v332
    %v341 = vmul.f32 %v238, %v332
    %v342 = vmul.f32 %v240, %v332
    %v343 = vadd.f32 %v339, %v337
    %v344 = vadd.f32 %v340, %v337
    %v345 = vadd.f32 %v341, %v337
    %v346 = vadd.f32 %v342, %v337
    %v347 = vmax.f32 %v343, 0.0
    %v348 = vmax.f32 %v344, 0.0
    %v349 = vmax.f32 %v345, 0.0
    %v350 = vmax.f32 %v346, 0.0
    %351 = vst [vmem:[#allocation5] sm:$0xff] %v347
    %352 = vst [vmem:[#allocation5 + $0x8] sm:$0xff] %v348
    %353 = vst [vmem:[#allocation5 + $0x10] sm:$0xff] %v349
    %354 = vst [vmem:[#allocation5 + $0x18] sm:$0xff] %v350
    %v355 = vmul.f32 %v189, %v332
    %v356 = vmul.f32 %v191, %v332
    %v357 = vmul.f32 %v242, %v332
    %v358 = vmul.f32 %v244, %v332
    %v359 = vadd.f32 %v355, %v337
    %v360 = vadd.f32 %v356, %v337
    %v361 = vadd.f32 %v357, %v337
    %v362 = vadd.f32 %v358, %v337
    %v363 = vmax.f32 %v359, 0.0
    %v364 = vmax.f32 %v360, 0.0
    %v365 = vmax.f32 %v361, 0.0
    %v366 = vmax.f32 %v362, 0.0
    %367 = vst [vmem:[#allocation5 + $0x20] sm:$0xff] %v363
    %368 = vst [vmem:[#allocation5 + $0x28] sm:$0xff] %v364
    %369 = vst [vmem:[#allocation5 + $0x30] sm:$0xff] %v365
    %370 = vst [vmem:[#allocation5 + $0x38] sm:$0xff] %v366
    %v371 = vmul.f32 %v195, %v332
    %v372 = vmul.f32 %v197, %v332
    %v373 = vmul.f32 %v248, %v332
    %v374 = vmul.f32 %v250, %v332
    %v375 = vadd.f32 %v371, %v337
    %v376 = vadd.f32 %v372, %v337
    %v377 = vadd.f32 %v373, %v337
    %v378 = vadd.f32 %v374, %v337
    %v379 = vmax.f32 %v375, 0.0
    %v380 = vmax.f32 %v376, 0.0
    %v381 = vmax.f32 %v377, 0.0
    %v382 = vmax.f32 %v378, 0.0
    %383 = vst [vmem:[#allocation5 + $0x40] sm:$0xff] %v379
    %384 = vst [vmem:[#allocation5 + $0x48] sm:$0xff] %v380
    %385 = vst [vmem:[#allocation5 + $0x50] sm:$0xff] %v381
    %386 = vst [vmem:[#allocation5 + $0x58] sm:$0xff] %v382
    %v387 = vmul.f32 %v199, %v332
    %v388 = vmul.f32 %v201, %v332
    %v389 = vmul.f32 %v252, %v332
    %v390 = vmul.f32 %v254, %v332
    %v391 = vadd.f32 %v387, %v337
    %v392 = vadd.f32 %v388, %v337
    %v393 = vadd.f32 %v389, %v337
    %v394 = vadd.f32 %v390, %v337
    %v395 = vmax.f32 %v391, 0.0
    %v396 = vmax.f32 %v392, 0.0
    %v397 = vmax.f32 %v393, 0.0
    %v398 = vmax.f32 %v394, 0.0
    %399 = vst [vmem:[#allocation5 + $0x60] sm:$0xff] %v395
    %400 = vst [vmem:[#allocation5 + $0x68] sm:$0xff] %v396
    %401 = vst [vmem:[#allocation5 + $0x70] sm:$0xff] %v397
    %402 = vst [vmem:[#allocation5 + $0x78] sm:$0xff] %v398
    // Predicated region
    $region22: #{tpu_custom_call.1} parent=1 // pred_check
      _
    $region23: #{tpu_custom_call.1} parent=1 // pred_check_branch
      %404 = sbr.rel (0) target = $region25
    $region24: #{tpu_custom_call.1} parent=1 // pred_region
      %s406 = ssub.s32 2048, 2048
      %407 = vsyncadd [#allocation4], %s406
      %s408 = sshll.u32 [#allocation5], 4
      %s409 = int_to_ptr.vmem [resolvable:$true] %s408
      %414 = dma.vmem_to_hbm [thread:$0]  %s409, 2048, %s4, [#allocation4], 512, 512, 32
    $region25: #{tpu_custom_call.1} parent=1 // pred_fallthru
      _
    // Predicated region
    $region26: #{tpu_custom_call.1} parent=1 // pred_check
      _
    $region27: #{tpu_custom_call.1} parent=1 // pred_check_branch
      %416 = sbr.rel (0) target = $region29
    $region28: #{tpu_custom_call.1} parent=1 // pred_region
      %417 = dma.done [#allocation4], 2048
    $region29: #{tpu_custom_call.1} parent=1 // pred_fallthru
      _
    %418 = vsyncpa [#allocation3], 1
    %419 = vsyncpa [#allocation4], 1

</llo_original>
